<compile_context>
chip_gen: v7x
topology: tpu7x:2x2x1
jax: 0.10.0
libtpu: 0.0.40
codegen_flags: <defaults>
</compile_context>

<pallas_src>
import jax
import jax.numpy as jnp
from jax.experimental import pallas as pl
from jax.experimental.pallas import tpu as pltpu

_LANE = 128  # TPU vreg lane width


def _softmax_dim0_kernel(x_ref, o_ref):
    # One (M, TN) column tile. The dim-0 reduction is fully local to the tile.
    #   exp                      -> EUP
    #   column sum over dim 0    -> XLU (sublane reduce)
    #   reciprocal (exact)       -> matches the reference's true division
    #   broadcast mul + downcast -> VPU
    x = x_ref[...].astype(jnp.float32)
    exp_x = jnp.exp(x)                                # (M, TN)
    denom = jnp.sum(exp_x, axis=0, keepdims=True)     # (1, TN) reduction over dim=0
    inv = pl.reciprocal(denom, approx=False)          # (1, TN)
    o_ref[...] = (exp_x * inv).astype(o_ref.dtype)    # broadcasts over dim=0


def _softmax_dim0_2d(x: jax.Array, *, max_block_n: int = 1024) -> jax.Array:
    m, n = x.shape

    if n <= _LANE:
        # Single tile along N; block dim equals the full array dim, which is
        # always a legal TPU block shape even when n is not 128-aligned.
        tn = n
    else:
        # Lane-dense tile width: multiple of 128 and <= n, budgeted so one
        # tile's f32 working set stays ~4 MiB; double-buffered input+output
        # plus temporaries then fit comfortably in the 32 MiB VMEM requested.
        tile_budget_bytes = 4 * 1024 * 1024
        tn_cap = max(_LANE, (tile_budget_bytes // max(m * 4, 1)) // _LANE * _LANE)
        tn = min(max_block_n, tn_cap, (n // _LANE) * _LANE)

    grid = (pl.cdiv(n, tn),)
    return pl.pallas_call(
        _softmax_dim0_kernel,
        out_shape=jax.ShapeDtypeStruct((m, n), x.dtype),
        grid=grid,
        in_specs=[pl.BlockSpec((m, tn), lambda j: (0, j))],
        out_specs=pl.BlockSpec((m, tn), lambda j: (0, j)),
        compiler_params=pltpu.CompilerParams(
            dimension_semantics=("parallel",),
            vmem_limit_bytes=32 * 1024 * 1024,
        ),
    )(x)


def softmax_dim0(x: jax.Array) -> jax.Array:
    """exp(x) / sum(exp(x), dim=0) as a Pallas TPU kernel.

    Accepts any rank >= 1: trailing dims are flattened into the lane axis and
    the reduction runs over the leading axis (dim=0), like the PyTorch module.
    """
    if x.ndim == 1:
        return _softmax_dim0_2d(x.reshape(x.shape[0], 1)).reshape(x.shape)
    if x.ndim == 2:
        return _softmax_dim0_2d(x)
    m = x.shape[0]
    return _softmax_dim0_2d(x.reshape(m, -1)).reshape(x.shape)


if __name__ == "__main__":
    def ref_softmax(v):
        e = jnp.exp(v)
        return e / jnp.sum(e, axis=0)

    # seq=8 rows (reduction axis), hidden=32 cols -- narrow single-tile path.
    x1 = jax.random.normal(jax.random.PRNGKey(0), (8, 32), dtype=jnp.float32)
    o1 = jax.block_until_ready(softmax_dim0(x1))
    assert o1.shape == x1.shape and o1.dtype == x1.dtype
    assert jnp.allclose(o1, ref_softmax(x1), atol=1e-6, rtol=1e-6)

    # Ragged N (not a multiple of 128): multi-tile grid + masked edge block,
    # no wrapper-side padding.
    x2 = jax.random.normal(jax.random.PRNGKey(1), (16, 200), dtype=jnp.float32)
    o2 = jax.block_until_ready(softmax_dim0(x2))
    assert jnp.allclose(o2, ref_softmax(x2), atol=1e-6, rtol=1e-6)

    # Rank-4 input (batch=2, channels=4, spatial=16x16), reduction over dim=0.
    x3 = jax.random.normal(jax.random.PRNGKey(2), (2, 4, 16, 16), dtype=jnp.float32)
    o3 = jax.block_until_ready(softmax_dim0(x3))
    r3 = jnp.exp(x3) / jnp.sum(jnp.exp(x3), axis=0)
    assert jnp.allclose(o3, r3, atol=1e-6, rtol=1e-6)

    print("KERNEL_OK")
</pallas_src>

<mosaic_0001>
module attributes {stable_mosaic.version = 11 : i64} {
  func.func @_softmax_dim0_kernel(%arg0: i32, %arg1: memref<8x32xf32, #tpu.memory_space<vmem>>, %arg2: memref<8x32xf32, #tpu.memory_space<vmem>>) attributes {dimension_semantics = [#tpu.dimension_semantics<parallel>], iteration_bounds = array<i64: 1>, scalar_prefetch = 0 : i64, scratch_operands = 0 : i64, tpu.core_type = #tpu.core_type<tc>, window_params = [{transform_indices = @transform_0, window_bounds = array<i64: 8, 32>}, {transform_indices = @transform_1, window_bounds = array<i64: 8, 32>}]} {
    %c0 = arith.constant 0 : index
    %c0_0 = arith.constant 0 : index
    %0 = vector.load %arg1[%c0, %c0_0] : memref<8x32xf32, #tpu.memory_space<vmem>>, vector<8x32xf32>
    %1 = math.exp %0 : vector<8x32xf32>
    %cst = arith.constant dense<0.000000e+00> : vector<32xf32>
    %2 = vector.multi_reduction <add>, %1, %cst [0] : vector<8x32xf32> to vector<32xf32>
    %3 = vector.shape_cast %2 : vector<32xf32> to vector<1x32xf32>
    %4 = tpu.reciprocal %3 : vector<1x32xf32> -> vector<1x32xf32>
    %5 = vector.broadcast %4 : vector<1x32xf32> to vector<8x32xf32>
    %6 = arith.mulf %1, %5 : vector<8x32xf32>
    %c0_1 = arith.constant 0 : index
    %c0_2 = arith.constant 0 : index
    %7 = vector.load %arg2[%c0_1, %c0_2] : memref<8x32xf32, #tpu.memory_space<vmem>>, vector<8x32xf32>
    tpu.vector_store %arg2[%c0_1, %c0_2], %6 {strides = array<i32>} : memref<8x32xf32, #tpu.memory_space<vmem>>, vector<8x32xf32>,
    return
  }
  func.func @transform_0(%arg0: i32) -> (i32, i32) {
    %c0_i32 = arith.constant 0 : i32
    %c0_i32_0 = arith.constant 0 : i32
    return %c0_i32, %arg0 : i32, i32
  }
  func.func @transform_1(%arg0: i32) -> (i32, i32) {
    %c0_i32 = arith.constant 0 : i32
    %c0_i32_0 = arith.constant 0 : i32
    return %c0_i32, %arg0 : i32, i32
  }
}

</mosaic_0001>

<llo_original>
// kernel: tpu_custom_call.1
$region0: #{tpu_custom_call.1}
  #allocation0 [shape = 'u32[]', space=smem, size = 0x4, offset = 0x4, fixed_abs, tag = 'smem constant byte address 0x4 - core index']
  #allocation1 [shape = 'u32[144,128]{1,0:T(1,128)}', space=vmem, size = 0x12000, scoped, tag = 'internal scratch']
  %s0 = inlined_call_operand.hbm [shape: f32[8,32], index: 0, kind: input, shape index: {}]
  %s1 = inlined_call_operand.hbm [shape: f32[8,32], index: 1, kind: output, shape index: {}]
  %s2 = sld [smem:[#allocation0]]
  $region18: #{tpu_custom_call.1} parent=0
    _
  %s4 = ssub.s32 1, %s2
  %s5 = scalar_select 0, %s4, %s2
  $region1: #{tpu_custom_call.1} parent=0
    #allocation2 [shape = 'u8[4096]{0}', space=vmem, size = 0x1000, scoped, tag = 'input window, operand 0, single buffered']
    #allocation3 [shape = 's32[1]{0}', space=sflag, size = 0x4, scoped, tag = 'scoped memory for tpu_custom_call.1']
    #allocation4 [shape = 's32[1]{0}', space=sflag, size = 0x4, scoped, tag = 'scoped memory for tpu_custom_call.1']
    #allocation5 [shape = 'u8[4096]{0}', space=vmem, size = 0x1000, scoped, tag = 'output window, operand 0, single buffered']
    %6 = vsyncpa [#allocation3], 0
    %7 = vsyncpa [#allocation4], 0
    // Predicated region
    $region2: #{tpu_custom_call.1} parent=1 // pred_check
      _
    $region3: #{tpu_custom_call.1} parent=1 // pred_check_branch
      %9 = sbr.rel (0) target = $region5
    $region4: #{tpu_custom_call.1} parent=1 // pred_region
      %s11 = ssub.s32 128, 128
      %12 = vsyncadd [#allocation3], %s11
      %s14 = sshll.u32 [#allocation2], 4
      %s15 = int_to_ptr.vmem [resolvable:$true] %s14
      %17 = dma.hbm_to_vmem [thread:$0]  %s0, 128, %s15, [#allocation3]
    $region5: #{tpu_custom_call.1} parent=1 // pred_fallthru
      _
    // Predicated region
    $region6: #{tpu_custom_call.1} parent=1 // pred_check
      _
    $region7: #{tpu_custom_call.1} parent=1 // pred_check_branch
      %19 = sbr.rel (0) target = $region9
    $region8: #{tpu_custom_call.1} parent=1 // pred_region
      %20 = dma.done [#allocation3], 128
    $region9: #{tpu_custom_call.1} parent=1 // pred_fallthru
      _
    %v21 = vld [vmem:[#allocation2] sm:$0xff]
    %v22 = vmul.f32 %v21, 1.442695
    %v23 = vpow.pop %v22
    %vm24 = vcmask 261120
    %v25 = vsel %vm24, %v23, 0.0
    %v26 = vrot.slane %v25, 4
    %v27 = vadd.f32 %v25, %v26
    %v28 = vrot.slane %v27, 2
    %v29 = vadd.f32 %v27, %v28
    %v30 = vrot.slane %v29, 1
    %v31 = vadd.f32 %v29, %v30
    %v32 = vrcp.pop %v31
    %v33 = vmul.f32 %v23, %v32
    %34 = vst.msk [vmem:[#allocation5] sm:$0xff] %vm24, %v33
    // Predicated region
    $region10: #{tpu_custom_call.1} parent=1 // pred_check
      _
    $region11: #{tpu_custom_call.1} parent=1 // pred_check_branch
      %36 = sbr.rel (0) target = $region13
    $region12: #{tpu_custom_call.1} parent=1 // pred_region
      %s38 = ssub.s32 128, 128
      %39 = vsyncadd [#allocation4], %s38
      %s41 = sshll.u32 [#allocation5], 4
      %s42 = int_to_ptr.vmem [resolvable:$true] %s41
      %44 = dma.vmem_to_hbm [thread:$0]  %s42, 128, %s1, [#allocation4]
    $region13: #{tpu_custom_call.1} parent=1 // pred_fallthru
      _
    // Predicated region
    $region14: #{tpu_custom_call.1} parent=1 // pred_check
      _
    $region15: #{tpu_custom_call.1} parent=1 // pred_check_branch
      %46 = sbr.rel (0) target = $region17
    $region16: #{tpu_custom_call.1} parent=1 // pred_region
      %47 = dma.done [#allocation4], 128
    $region17: #{tpu_custom_call.1} parent=1 // pred_fallthru
      _
    %48 = vsyncpa [#allocation3], 1
    %49 = vsyncpa [#allocation4], 1

</llo_original>
